<compile_context>
chip_gen: v7x
topology: tpu7x:2x2x1
jax: 0.10.0
libtpu: 0.0.40
codegen_flags: <defaults>
</compile_context>

<pallas_src>
import functools

import jax
import jax.numpy as jnp
import numpy as np
from jax.experimental import pallas as pl
from jax.experimental.pallas import tpu as pltpu

# TODO(synk): SchNet.from_qm9_pretrained checkpoint loading has no Pallas equivalent; the
# embedding weight is passed in as a plain array.


def _gather_kernel(z_ref, table_ref, emb_ref):
    """h0 tile = one_hot(z_tile) @ table  (exact row gather on the MXU)."""
    tn = z_ref.shape[0]
    trows = table_ref.shape[0]
    cols = jax.lax.broadcasted_iota(jnp.int32, (tn, trows), 1)
    sel = (cols == z_ref[...]).astype(jnp.float32)                     # (TN, Trows)
    emb_ref[...] = jnp.dot(sel, table_ref[...],
                           preferred_element_type=jnp.float32)         # (TN, H)


def _gather_pool_kernel(mode, z_ref, oh_ref, table_ref, emb_ref, pooled_ref, cnt_ref):
    """Embedding gather + fused global add/mean pool accumulated across node tiles."""
    step = pl.program_id(0)
    tn = z_ref.shape[0]
    trows = table_ref.shape[0]

    # Gather: exact one-hot matmul against the VMEM-resident table.
    cols = jax.lax.broadcasted_iota(jnp.int32, (tn, trows), 1)
    sel = (cols == z_ref[...]).astype(jnp.float32)                     # (TN, Trows)
    emb = jnp.dot(sel, table_ref[...], preferred_element_type=jnp.float32)
    emb_ref[...] = emb                                                 # (TN, H)

    @pl.when(step == 0)
    def _():
        pooled_ref[...] = jnp.zeros_like(pooled_ref)
        cnt_ref[...] = jnp.zeros_like(cnt_ref)

    # scatter-add by graph: (G_pad, TN) x (TN, H); padded / out-of-range nodes have all-zero
    # one-hot columns, so they contribute nothing.
    oh = oh_ref[...]                                                   # (G_pad, TN)
    pooled_ref[...] += jnp.dot(oh, emb, preferred_element_type=jnp.float32)
    cnt_ref[...] += jnp.sum(oh, axis=1, keepdims=True)                 # (G_pad, 1)

    if mode == "mean":
        @pl.when(step == pl.num_programs(0) - 1)
        def _():
            pooled_ref[...] = pooled_ref[...] / jnp.maximum(cnt_ref[...], 1.0)


def schnet_extract(z, batch, emb_table, num_graphs, pool=None, tn=128):
    """Pallas implementation of SchNetEmbeddingExtractor.forward.

    pool=None  -> returns node embeddings h0, shape (N, H)
    pool='add' / 'mean' -> returns pooled graph embeddings, shape (num_graphs, H)
    """
    assert pool in (None, "add", "mean")
    assert tn % 128 == 0, "node tile must be lane-aligned (multiple of 128)"
    n = z.shape[0]
    n_rows, h = emb_table.shape

    n_pad = ((n + tn - 1) // tn) * tn
    t_pad = ((n_rows + 127) // 128) * 128

    table_p = jnp.zeros((t_pad, h), jnp.float32).at[:n_rows].set(
        emb_table.astype(jnp.float32))
    z_p = jnp.zeros((n_pad, 1), jnp.int32).at[:n, 0].set(z.astype(jnp.int32))

    grid = (n_pad // tn,)

    if pool is None:
        emb = pl.pallas_call(
            _gather_kernel,
            out_shape=jax.ShapeDtypeStruct((n_pad, h), jnp.float32),
            grid=grid,
            in_specs=[
                pl.BlockSpec((tn, 1), lambda i: (i, 0)),       # z tile
                pl.BlockSpec((t_pad, h), lambda i: (0, 0)),    # embedding table (resident)
            ],
            out_specs=pl.BlockSpec((tn, h), lambda i: (i, 0)),
            compiler_params=pltpu.CompilerParams(
                dimension_semantics=("parallel",)),
        )(z_p, table_p)
        return emb[:n]

    # Pooled path: build the (G_pad, N_pad) graph one-hot in the wrapper (tiny), tile its
    # columns alongside the node tiles, and accumulate the pooled sums in-kernel.
    g_pad = max(((num_graphs + 7) // 8) * 8, 8)
    batch_p = jnp.zeros((n_pad,), jnp.int32).at[:n].set(batch.astype(jnp.int32))
    batch_p = jnp.where(jnp.arange(n_pad) < n, batch_p, -1)            # padding matches nothing
    onehot_b = (batch_p[None, :] ==
                jnp.arange(g_pad, dtype=jnp.int32)[:, None]).astype(jnp.float32)

    kernel = functools.partial(_gather_pool_kernel, pool)
    _, pooled = pl.pallas_call(
        kernel,
        out_shape=(jax.ShapeDtypeStruct((n_pad, h), jnp.float32),
                   jax.ShapeDtypeStruct((g_pad, h), jnp.float32)),
        grid=grid,
        in_specs=[
            pl.BlockSpec((tn, 1), lambda i: (i, 0)),           # z tile
            pl.BlockSpec((g_pad, tn), lambda i: (0, i)),       # graph one-hot, column tile
            pl.BlockSpec((t_pad, h), lambda i: (0, 0)),        # embedding table (resident)
        ],
        out_specs=(pl.BlockSpec((tn, h), lambda i: (i, 0)),    # node embeddings
                   pl.BlockSpec((g_pad, h), lambda i: (0, 0))),# pooled accumulator
        scratch_shapes=[pltpu.VMEM((g_pad, 1), jnp.float32)],  # per-graph node counts
        compiler_params=pltpu.CompilerParams(
            dimension_semantics=("arbitrary",)),               # pooled accumulates across tiles
    )(z_p, onehot_b, table_p)
    return pooled[:num_graphs]


def reference(z, batch, emb_table, num_graphs, pool=None):
    """Pure-JAX re-implementation of the PyTorch forward (for checking)."""
    h0 = emb_table[z]
    if pool is None:
        return h0
    onehot = (batch[None, :] ==
              jnp.arange(num_graphs, dtype=batch.dtype)[:, None]).astype(jnp.float32)
    pooled = onehot @ h0
    if pool == "mean":
        pooled = pooled / jnp.maximum(onehot.sum(axis=1, keepdims=True), 1.0)
    return pooled


if __name__ == "__main__":
    key = jax.random.PRNGKey(0)
    kz, kt = jax.random.split(key)

    N, H, G = 200, 128, 2                       # 200 atoms, hidden=128, 2 graphs
    z = jax.random.randint(kz, (N,), 1, 10, dtype=jnp.int32)        # QM9-like atomic numbers
    batch = jnp.concatenate([jnp.zeros(100, jnp.int32), jnp.ones(100, jnp.int32)])
    emb_table = jax.random.normal(kt, (100, H), jnp.float32)        # nn.Embedding(100, H) weight

    h0 = jax.block_until_ready(schnet_extract(z, batch, emb_table, G, pool=None))
    p_mean = jax.block_until_ready(schnet_extract(z, batch, emb_table, G, pool="mean"))
    p_add = jax.block_until_ready(schnet_extract(z, batch, emb_table, G, pool="add"))

    np.testing.assert_allclose(np.asarray(h0),
                               np.asarray(reference(z, batch, emb_table, G, None)),
                               rtol=1e-4, atol=1e-4)
    np.testing.assert_allclose(np.asarray(p_mean),
                               np.asarray(reference(z, batch, emb_table, G, "mean")),
                               rtol=1e-4, atol=1e-4)
    np.testing.assert_allclose(np.asarray(p_add),
                               np.asarray(reference(z, batch, emb_table, G, "add")),
                               rtol=1e-4, atol=1e-4)
    print("KERNEL_OK")
</pallas_src>

<mosaic_0001>
module attributes {stable_mosaic.version = 11 : i64} {
  func.func @_gather_kernel(%arg0: i32, %arg1: memref<128x1xi32, #tpu.memory_space<vmem>>, %arg2: memref<128x128xf32, #tpu.memory_space<vmem>>, %arg3: memref<128x128xf32, #tpu.memory_space<vmem>>) attributes {dimension_semantics = [#tpu.dimension_semantics<parallel>], iteration_bounds = array<i64: 2>, scalar_prefetch = 0 : i64, scratch_operands = 0 : i64, tpu.core_type = #tpu.core_type<tc>, window_params = [{transform_indices = @transform_0, window_bounds = array<i64: 128, 1>}, {pipeline_mode = #tpu.pipeline_mode<synchronous>, transform_indices = @transform_1, window_bounds = array<i64: 128, 128>}, {transform_indices = @transform_2, window_bounds = array<i64: 128, 128>}]} {
    %0 = tpu.iota {dimensions = array<i32: 1>} : vector<128x128xi32>
    %c0 = arith.constant 0 : index
    %c0_0 = arith.constant 0 : index
    %1 = vector.load %arg1[%c0, %c0_0] : memref<128x1xi32, #tpu.memory_space<vmem>>, vector<128x1xi32>
    %2 = vector.broadcast %1 : vector<128x1xi32> to vector<128x128xi32>
    %3 = arith.cmpi eq, %0, %2 : vector<128x128xi32>
    %4 = arith.extui %3 : vector<128x128xi1> to vector<128x128xi32>
    %5 = arith.sitofp %4 : vector<128x128xi32> to vector<128x128xf32>
    %c0_1 = arith.constant 0 : index
    %c0_2 = arith.constant 0 : index
    %6 = vector.load %arg2[%c0_1, %c0_2] : memref<128x128xf32, #tpu.memory_space<vmem>>, vector<128x128xf32>
    %cst = arith.constant dense<0.000000e+00> : vector<128x128xf32>
    %7 = tpu.matmul %5, %6, %cst {dimension_numbers = #tpu.dot_dimension_numbers<[1], [0], [0], [1], [0, 0, 1, 1], [], []>} : vector<128x128xf32>, vector<128x128xf32>, vector<128x128xf32> -> vector<128x128xf32>
    %c0_3 = arith.constant 0 : index
    %c0_4 = arith.constant 0 : index
    %8 = vector.load %arg3[%c0_3, %c0_4] : memref<128x128xf32, #tpu.memory_space<vmem>>, vector<128x128xf32>
    tpu.vector_store %arg3[%c0_3, %c0_4], %7 {strides = array<i32>} : memref<128x128xf32, #tpu.memory_space<vmem>>, vector<128x128xf32>,
    return
  }
  func.func @transform_0(%arg0: i32) -> (i32, i32) {
    %c0_i32 = arith.constant 0 : i32
    %c0_i32_0 = arith.constant 0 : i32
    return %arg0, %c0_i32 : i32, i32
  }
  func.func @transform_1(%arg0: i32) -> (i32, i32) {
    %c0_i32 = arith.constant 0 : i32
    %c0_i32_0 = arith.constant 0 : i32
    %c0_i32_1 = arith.constant 0 : i32
    return %c0_i32, %c0_i32_0 : i32, i32
  }
  func.func @transform_2(%arg0: i32) -> (i32, i32) {
    %c0_i32 = arith.constant 0 : i32
    %c0_i32_0 = arith.constant 0 : i32
    return %arg0, %c0_i32 : i32, i32
  }
}

</mosaic_0001>

<llo_original>
// kernel: tpu_custom_call.1
$region0: #{tpu_custom_call.1}
  #allocation0 [shape = 'u32[]', space=smem, size = 0x4, offset = 0x4, fixed_abs, tag = 'smem constant byte address 0x4 - core index']
  #allocation1 [shape = 'u32[144,128]{1,0:T(1,128)}', space=vmem, size = 0x12000, scoped, tag = 'internal scratch']
  %s0 = inlined_call_operand.vmem [shape: s32[256,1], index: 0, kind: input, shape index: {}]
  %s1 = inlined_call_operand.vmem [shape: f32[128,128], index: 1, kind: input, shape index: {}]
  %s2 = inlined_call_operand.hbm [shape: f32[256,128], index: 2, kind: output, shape index: {}]
  %s3 = sld [smem:[#allocation0]]
  $region41: #{tpu_custom_call.1} parent=0
    _
  %s5 = ssub.s32 1, %s3
  %s6 = scalar_select 0, %s5, %s3
  $region1: #{tpu_custom_call.1} parent=0
    #allocation2 [shape = 'u8[131072]{0}', space=vmem, size = 0x20000, scoped, tag = 'output window, operand 0']
    #allocation3 [shape = 's32[2]{0}', space=sflag, size = 0x8, scoped, tag = 'scoped memory for tpu_custom_call.1']
    %7 = vsyncpa [#allocation3], 0
    %s8 = scalar_lea.sflag [#allocation3], 1
    %9 = vsyncpa %s8, 0
    loop: start=0, step=1, limit=4
    $region2: #{tpu_custom_call.1} parent=1 // loop_pre_header
      _
    $region3: #{tpu_custom_call.1} parent=1 // loop_header
      %s11 = sphi 0, %s15
      %p12 = scmp.ge.s32.totalorder %s11, 4
      %s21 = sphi 0, %s23
      %s24 = sphi 0, %s21
      %s25 = sphi 0, %s24
      %s41 = sphi 0, %s25
      %s45 = sphi 0, %s45
      %s47 = sphi 0, %s45
      %s48 = sphi 0, %s47
      %s62 = sphi 0, %s48
      %s68 = sphi 0, %s70
      %s71 = sphi 0, %s68
      %s72 = sphi 0, %s71
      %s88 = sphi 0, %s72
    $region4: #{tpu_custom_call.1} parent=1 // loop_header_branch
      %14 = sbr.rel (%p12) target = $region8
    $region5: #{tpu_custom_call.1} parent=1 // loop_body
      %s16 = ssub.s32 %s11, 1
      %s17 = ssub.s32 %s11, 2
      %s18 = sadd.s32 %s11, 1
      %s19 = ssub.s32 %s11, %s18
      %p20 = scmp.eq.s32.totalorder %s19, 0
      %s22 = sadd.s32 %s21, 1
      %s23 = scalar_select %p20, %s21, %s22
      %p26 = pneg %p20
      %p27 = scmp.eq.s32.totalorder %s11, 1
      %p28 = por %p26, %p27
      %p29 = scmp.ne.s32.totalorder %s21, %s24
      %p30 = scmp.eq.s32.totalorder %s11, 0
      %p31 = por %p29, %p30
      %p32 = scmp.ne.s32.totalorder %s21, %s24
      %p33 = scmp.eq.s32.totalorder %s16, 1
      %p34 = por %p32, %p33
      %p35 = scmp.ne.s32.totalorder %s24, %s25
      %p36 = scmp.eq.s32.totalorder %s16, 0
      %p37 = por %p35, %p36
      %p38 = scmp.ne.s32.totalorder %s24, %s25
      %p39 = scmp.eq.s32.totalorder %s17, 1
      %p40 = por %p38, %p39
      %p42 = scmp.ne.s32.totalorder %s25, %s41
      %p43 = scmp.eq.s32.totalorder %s17, 0
      %p44 = por %p42, %p43
      %s46 = sadd.s32 %s45, 1
      %p49 = scmp.eq.s32.totalorder %s11, 1
      %p50 = scmp.ne.s32.totalorder %s45, %s47
      %p51 = scmp.eq.s32.totalorder %s11, 0
      %p52 = por %p50, %p51
      %p53 = scmp.ne.s32.totalorder %s45, %s47
      %p54 = scmp.eq.s32.totalorder %s16, 1
      %p55 = por %p53, %p54
      %p56 = scmp.ne.s32.totalorder %s47, %s48
      %p57 = scmp.eq.s32.totalorder %s16, 0
      %p58 = por %p56, %p57
      %p59 = scmp.ne.s32.totalorder %s47, %s48
      %p60 = scmp.eq.s32.totalorder %s17, 1
      %p61 = por %p59, %p60
      %p63 = scmp.ne.s32.totalorder %s48, %s62
      %p64 = scmp.eq.s32.totalorder %s17, 0
      %p65 = por %p63, %p64
      %s66 = ssub.s32 %s11, %s18
      %p67 = scmp.eq.s32.totalorder %s66, 0
      %s69 = sadd.s32 %s68, 1
      %s70 = scalar_select %p67, %s68, %s69
      %p73 = pneg %p67
      %p74 = scmp.eq.s32.totalorder %s11, 1
      %p75 = por %p73, %p74
      %p76 = scmp.ne.s32.totalorder %s68, %s71
      %p77 = scmp.eq.s32.totalorder %s11, 0
      %p78 = por %p76, %p77
      %p79 = scmp.ne.s32.totalorder %s68, %s71
      %p80 = scmp.eq.s32.totalorder %s16, 1
      %p81 = por %p79, %p80
      %p82 = scmp.ne.s32.totalorder %s71, %s72
      %p83 = scmp.eq.s32.totalorder %s16, 0
      %p84 = por %p82, %p83
      %p85 = scmp.ne.s32.totalorder %s71, %s72
      %p86 = scmp.eq.s32.totalorder %s17, 1
      %p87 = por %p85, %p86
      %p89 = scmp.ne.s32.totalorder %s72, %s88
      %p90 = scmp.eq.s32.totalorder %s17, 0
      %p91 = por %p89, %p90
      %p92 = scmp.le.s32.totalorder 1, %s11
      %p93 = scmp.lt.s32.totalorder %s11, 3
      %p94 = pnand %p92, %p93
      %p95 = pneg %p94
      // Predicated region
      $region9: #{tpu_custom_call.1} parent=5 // pred_check
        _
      $region10: #{tpu_custom_call.1} parent=5 // pred_check_branch
        %97 = sbr.rel (%p94) target = $region12
      $region11: #{tpu_custom_call.1} parent=5 // pred_region
        %s98 = ssub.s32 %s11, 1
        // Predicated region
        $region13: #{tpu_custom_call.1} parent=11 // pred_check
          %p99 = pneg %p58
        $region14: #{tpu_custom_call.1} parent=11 // pred_check_branch
          %101 = sbr.rel (%p99) target = $region16
        $region15: #{tpu_custom_call.1} parent=11 // pred_region
          _
        $region16: #{tpu_custom_call.1} parent=11 // pred_fallthru
          _
      $region12: #{tpu_custom_call.1} parent=5 // pred_fallthru
        _
      %p102 = scmp.lt.s32.totalorder %s11, 2
      // Predicated region
      $region17: #{tpu_custom_call.1} parent=5 // pred_check
        %p103 = pneg %p102
      $region18: #{tpu_custom_call.1} parent=5 // pred_check_branch
        %105 = sbr.rel (%p103) target = $region20
      $region19: #{tpu_custom_call.1} parent=5 // pred_region
        // Predicated region
        $region21: #{tpu_custom_call.1} parent=19 // pred_check
          %p106 = pneg %p31
        $region22: #{tpu_custom_call.1} parent=19 // pred_check_branch
          %108 = sbr.rel (%p106) target = $region24
        $region23: #{tpu_custom_call.1} parent=19 // pred_region
          %s109 = smul.u32 16, %s11
          %p110 = scmp.lt.s32.totalorder %s109, 31
          %s111 = scalar_select %p110, %s109, 31
          %s112 = smul.addr %s111, 8
          %s113 = scalar_lea.vmem %s0, %s112
          %s114 = smul.u32 16, %s11
        $region24: #{tpu_custom_call.1} parent=19 // pred_fallthru
          _
      $region20: #{tpu_custom_call.1} parent=5 // pred_fallthru
        _
      %p115 = scmp.le.s32.totalorder 1, %s11
      %p116 = scmp.lt.s32.totalorder %s11, 3
      %p117 = pnand %p115, %p116
      %p118 = pneg %p117
      // Predicated region
      $region25: #{tpu_custom_call.1} parent=5 // pred_check
        _
      $region26: #{tpu_custom_call.1} parent=5 // pred_check_branch
        %120 = sbr.rel (%p117) target = $region28
      $region27: #{tpu_custom_call.1} parent=5 // pred_region
        %s121 = ssub.s32 %s11, 1
        %s122 = smul.u32 16, %s16
        %p123 = scmp.lt.s32.totalorder %s122, 31
        %s124 = scalar_select %p123, %s122, 31
        %s125 = smul.addr %s124, 8
        %s126 = scalar_lea.vmem %s0, %s125
        %p127 = pneg %p37
        %p128 = pneg %p34
        %p129 = pneg %p58
        %p130 = pneg %p55
        %p131 = pneg %p84
        %p132 = pneg %p81
        %s133 = sand.u32 %s71, 1
        %s134 = scalar_lea.sflag [#allocation3], %s133
        %s135 = sand.u32 %s71, 1
        %s136 = smul.addr %s135, 128
        %s137 = scalar_lea.vmem [#allocation2], %s136
        %s138 = smul.u32 16, %s16
        %p139 = scmp.lt.s32.totalorder %s138, 31
        %s140 = scalar_select %p139, %s138, 31
        %s141 = smul.addr %s140, 8
        %s142 = scalar_lea.vmem %s0, %s141
        %s143 = smul.u32 16, %s16
        %s144 = smul.u32 16, %s16
        %v145 = vlaneseq
        %v146 = vand.u32 %v145, 127
        %v147 = vld [vmem:[%s142] sm:$0xff]
        %v148 = vld [vmem:[%s142 + $0x8] sm:$0xff]
        %v149 = vld [vmem:[%s142 + $0x10] sm:$0xff]
        %v150 = vld [vmem:[%s142 + $0x18] sm:$0xff]
        %v151 = vld [vmem:[%s142 + $0x20] sm:$0xff]
        %v152 = vld [vmem:[%s142 + $0x28] sm:$0xff]
        %v153 = vld [vmem:[%s142 + $0x30] sm:$0xff]
        %v154 = vld [vmem:[%s142 + $0x38] sm:$0xff]
        %v155 = vld [vmem:[%s142 + $0x40] sm:$0xff]
        %v156 = vld [vmem:[%s142 + $0x48] sm:$0xff]
        %v157 = vld [vmem:[%s142 + $0x50] sm:$0xff]
        %v158 = vld [vmem:[%s142 + $0x58] sm:$0xff]
        %v159 = vld [vmem:[%s142 + $0x60] sm:$0xff]
        %v160 = vld [vmem:[%s142 + $0x68] sm:$0xff]
        %v161 = vld [vmem:[%s142 + $0x70] sm:$0xff]
        %v162 = vld [vmem:[%s142 + $0x78] sm:$0xff]
        %163 = vset.pattern.permute.xlu0 0
        %164 = vperm.xlu0 %163, %v147
        %v165 = vpop.permute.xlu0 %164
        %166 = vset.pattern.permute.xlu0 0
        %167 = vperm.xlu0 %166, %v148
        %v168 = vpop.permute.xlu0 %167
        %169 = vset.pattern.permute.xlu0 0
        %170 = vperm.xlu0 %169, %v149
        %v171 = vpop.permute.xlu0 %170
        %172 = vset.pattern.permute.xlu0 0
        %173 = vperm.xlu0 %172, %v150
        %v174 = vpop.permute.xlu0 %173
        %175 = vset.pattern.permute.xlu0 0
        %176 = vperm.xlu0 %175, %v151
        %v177 = vpop.permute.xlu0 %176
        %178 = vset.pattern.permute.xlu0 0
        %179 = vperm.xlu0 %178, %v152
        %v180 = vpop.permute.xlu0 %179
        %181 = vset.pattern.permute.xlu0 0
        %182 = vperm.xlu0 %181, %v153
        %v183 = vpop.permute.xlu0 %182
        %184 = vset.pattern.permute.xlu0 0
        %185 = vperm.xlu0 %184, %v154
        %v186 = vpop.permute.xlu0 %185
        %187 = vset.pattern.permute.xlu0 0
        %188 = vperm.xlu0 %187, %v155
        %v189 = vpop.permute.xlu0 %188
        %190 = vset.pattern.permute.xlu0 0
        %191 = vperm.xlu0 %190, %v156
        %v192 = vpop.permute.xlu0 %191
        %193 = vset.pattern.permute.xlu0 0
        %194 = vperm.xlu0 %193, %v157
        %v195 = vpop.permute.xlu0 %194
        %196 = vset.pattern.permute.xlu0 0
        %197 = vperm.xlu0 %196, %v158
        %v198 = vpop.permute.xlu0 %197
        %199 = vset.pattern.permute.xlu0 0
        %200 = vperm.xlu0 %199, %v159
        %v201 = vpop.permute.xlu0 %200
        %202 = vset.pattern.permute.xlu0 0
        %203 = vperm.xlu0 %202, %v160
        %v204 = vpop.permute.xlu0 %203
        %205 = vset.pattern.permute.xlu0 0
        %206 = vperm.xlu0 %205, %v161
        %v207 = vpop.permute.xlu0 %206
        %208 = vset.pattern.permute.xlu0 0
        %209 = vperm.xlu0 %208, %v162
        %v210 = vpop.permute.xlu0 %209
        %vm211 = vcmp.eq.s32.totalorder %v146, %v165
        %vm212 = vcmp.eq.s32.totalorder %v146, %v168
        %vm213 = vcmp.eq.s32.totalorder %v146, %v171
        %vm214 = vcmp.eq.s32.totalorder %v146, %v174
        %vm215 = vcmp.eq.s32.totalorder %v146, %v177
        %vm216 = vcmp.eq.s32.totalorder %v146, %v180
        %vm217 = vcmp.eq.s32.totalorder %v146, %v183
        %vm218 = vcmp.eq.s32.totalorder %v146, %v186
        %vm219 = vcmp.eq.s32.totalorder %v146, %v189
        %vm220 = vcmp.eq.s32.totalorder %v146, %v192
        %vm221 = vcmp.eq.s32.totalorder %v146, %v195
        %vm222 = vcmp.eq.s32.totalorder %v146, %v198
        %vm223 = vcmp.eq.s32.totalorder %v146, %v201
        %vm224 = vcmp.eq.s32.totalorder %v146, %v204
        %vm225 = vcmp.eq.s32.totalorder %v146, %v207
        %vm226 = vcmp.eq.s32.totalorder %v146, %v210
        %v227 = vsel %vm211, 1, 0
        %v228 = vsel %vm212, 1, 0
        %v229 = vsel %vm213, 1, 0
        %v230 = vsel %vm214, 1, 0
        %v231 = vsel %vm215, 1, 0
        %v232 = vsel %vm216, 1, 0
        %v233 = vsel %vm217, 1, 0
        %v234 = vsel %vm218, 1, 0
        %v235 = vsel %vm219, 1, 0
        %v236 = vsel %vm220, 1, 0
        %v237 = vsel %vm221, 1, 0
        %v238 = vsel %vm222, 1, 0
        %v239 = vsel %vm223, 1, 0
        %v240 = vsel %vm224, 1, 0
        %v241 = vsel %vm225, 1, 0
        %v242 = vsel %vm226, 1, 0
        %v243 = vcvt.s32.f32 %v227
        %v244 = vcvt.s32.f32 %v228
        %v245 = vcvt.s32.f32 %v229
        %v246 = vcvt.s32.f32 %v230
        %v247 = vcvt.s32.f32 %v231
        %v248 = vcvt.s32.f32 %v232
        %v249 = vcvt.s32.f32 %v233
        %v250 = vcvt.s32.f32 %v234
        %v251 = vcvt.s32.f32 %v235
        %v252 = vcvt.s32.f32 %v236
        %v253 = vcvt.s32.f32 %v237
        %v254 = vcvt.s32.f32 %v238
        %v255 = vcvt.s32.f32 %v239
        %v256 = vcvt.s32.f32 %v240
        %v257 = vcvt.s32.f32 %v241
        %v258 = vcvt.s32.f32 %v242
        %v259 = vld [vmem:[%s1] sm:$0xff]
        %v260 = vld [vmem:[%s1 + $0x8] sm:$0xff]
        %v261 = vld [vmem:[%s1 + $0x10] sm:$0xff]
        %v262 = vld [vmem:[%s1 + $0x18] sm:$0xff]
        %v263 = vld [vmem:[%s1 + $0x20] sm:$0xff]
        %v264 = vld [vmem:[%s1 + $0x28] sm:$0xff]
        %v265 = vld [vmem:[%s1 + $0x30] sm:$0xff]
        %v266 = vld [vmem:[%s1 + $0x38] sm:$0xff]
        %v267 = vld [vmem:[%s1 + $0x40] sm:$0xff]
        %v268 = vld [vmem:[%s1 + $0x48] sm:$0xff]
        %v269 = vld [vmem:[%s1 + $0x50] sm:$0xff]
        %v270 = vld [vmem:[%s1 + $0x58] sm:$0xff]
        %v271 = vld [vmem:[%s1 + $0x60] sm:$0xff]
        %v272 = vld [vmem:[%s1 + $0x68] sm:$0xff]
        %v273 = vld [vmem:[%s1 + $0x70] sm:$0xff]
        %v274 = vld [vmem:[%s1 + $0x78] sm:$0xff]
        %275 = vmatprep.subr.mxu0 0.0
        %276 = vmatpush1.msra.mxu0 %v259
        %277 = vmatprep.subr.mxu0 0.0
        %278 = vmatpush1.msra.mxu0 %v260
        %279 = vmatprep.subr.mxu0 0.0
        %280 = vmatpush1.msra.mxu0 %v261
        %281 = vmatprep.subr.mxu0 0.0
        %282 = vmatpush1.msra.mxu0 %v262
        %283 = vmatprep.subr.mxu0 0.0
        %284 = vmatpush1.msra.mxu0 %v263
        %285 = vmatprep.subr.mxu0 0.0
        %286 = vmatpush1.msra.mxu0 %v264
        %287 = vmatprep.subr.mxu0 0.0
        %288 = vmatpush1.msra.mxu0 %v265
        %289 = vmatprep.subr.mxu0 0.0
        %290 = vmatpush1.msra.mxu0 %v266
        %291 = vmatprep.subr.mxu0 0.0
        %292 = vmatpush1.msra.mxu0 %v267
        %293 = vmatprep.subr.mxu0 0.0
        %294 = vmatpush1.msra.mxu0 %v268
        %295 = vmatprep.subr.mxu0 0.0
        %296 = vmatpush1.msra.mxu0 %v269
        %297 = vmatprep.subr.mxu0 0.0
        %298 = vmatpush1.msra.mxu0 %v270
        %299 = vmatprep.subr.mxu0 0.0
        %300 = vmatpush1.msra.mxu0 %v271
        %301 = vmatprep.subr.mxu0 0.0
        %302 = vmatpush1.msra.mxu0 %v272
        %303 = vmatprep.subr.mxu0 0.0
        %304 = vmatpush1.msra.mxu0 %v273
        %305 = vmatprep.subr.mxu0 0.0
        %306 = vmatpush1.msra.mxu0 %v274
        %307 = vmatprep.subr.mxu0 0.0
        %308 = vmatpush1.msra.mxu0 0.0
        %309 = vmatprep.subr.mxu0 0.0
        %310 = vmatpush1.msra.mxu0 0.0
        %311 = vmatprep.subr.mxu0 0.0
        %312 = vmatpush1.msra.mxu0 0.0
        %313 = vmatprep.subr.mxu0 0.0
        %314 = vmatpush1.msra.mxu0 0.0
        %315 = vmatprep.subr.mxu0 0.0
        %316 = vmatpush1.msra.mxu0 0.0
        %317 = vmatprep.subr.mxu0 0.0
        %318 = vmatpush1.msra.mxu0 0.0
        %319 = vmatprep.subr.mxu0 0.0
        %320 = vmatpush1.msra.mxu0 0.0
        %321 = vmatprep.subr.mxu0 0.0
        %322 = vmatpush1.msra.mxu0 0.0
        %323 = vmatprep.subr.mxu0 0.0
        %324 = vmatpush1.msra.mxu0 0.0
        %325 = vmatprep.subr.mxu0 0.0
        %326 = vmatpush1.msra.mxu0 0.0
        %327 = vmatprep.subr.mxu0 0.0
        %328 = vmatpush1.msra.mxu0 0.0
        %329 = vmatprep.subr.mxu0 0.0
        %330 = vmatpush1.msra.mxu0 0.0
        %331 = vmatprep.subr.mxu0 0.0
        %332 = vmatpush1.msra.mxu0 0.0
        %333 = vmatprep.subr.mxu0 0.0
        %334 = vmatpush1.msra.mxu0 0.0
        %335 = vmatprep.subr.mxu0 0.0
        %336 = vmatpush1.msra.mxu0 0.0
        %337 = vmatprep.subr.mxu0 0.0
        %338 = vmatpush1.msra.mxu0 0.0
        %339 = vmatprep.mubr.f32.mxu0 0.0
        %340 = vmatmul.mubr.f32.gmra.mrb[0].mxu0 %v243
        %v341 = vpop.f32.mrb[0].mxu0
        %v342 = vadd.f32 0.0, %v341
        %v343 = vpop.f32.mrb[0].mxu0
        %344 = vmatprep.mubr.f32.mxu0 0.0
        %345 = vmatmul.mubr.f32.gmra.mrb[0].mxu0 %v244
        %v346 = vpop.f32.mrb[0].mxu0
        %v347 = vadd.f32 0.0, %v346
        %v348 = vpop.f32.mrb[0].mxu0
        %349 = vmatprep.mubr.f32.mxu0 0.0
        %350 = vmatmul.mubr.f32.gmra.mrb[0].mxu0 %v245
        %v351 = vpop.f32.mrb[0].mxu0
        %v352 = vadd.f32 0.0, %v351
        %v353 = vpop.f32.mrb[0].mxu0
        %354 = vmatprep.mubr.f32.mxu0 0.0
        %355 = vmatmul.mubr.f32.gmra.mrb[0].mxu0 %v246
        %v356 = vpop.f32.mrb[0].mxu0
        %v357 = vadd.f32 0.0, %v356
        %v358 = vpop.f32.mrb[0].mxu0
        %359 = vmatprep.mubr.f32.mxu0 0.0
        %360 = vmatmul.mubr.f32.gmra.mrb[0].mxu0 %v247
        %v361 = vpop.f32.mrb[0].mxu0
        %v362 = vadd.f32 0.0, %v361
        %v363 = vpop.f32.mrb[0].mxu0
        %364 = vmatprep.mubr.f32.mxu0 0.0
        %365 = vmatmul.mubr.f32.gmra.mrb[0].mxu0 %v248
        %v366 = vpop.f32.mrb[0].mxu0
        %v367 = vadd.f32 0.0, %v366
        %v368 = vpop.f32.mrb[0].mxu0
        %369 = vmatprep.mubr.f32.mxu0 0.0
        %370 = vmatmul.mubr.f32.gmra.mrb[0].mxu0 %v249
        %v371 = vpop.f32.mrb[0].mxu0
        %v372 = vadd.f32 0.0, %v371
        %v373 = vpop.f32.mrb[0].mxu0
        %374 = vmatprep.mubr.f32.mxu0 0.0
        %375 = vmatmul.mubr.f32.gmra.mrb[0].mxu0 %v250
        %v376 = vpop.f32.mrb[0].mxu0
        %v377 = vadd.f32 0.0, %v376
        %v378 = vpop.f32.mrb[0].mxu0
        %379 = vmatprep.mubr.f32.mxu0 0.0
        %380 = vmatmul.mubr.f32.gmra.mrb[0].mxu0 %v251
        %v381 = vpop.f32.mrb[0].mxu0
        %v382 = vadd.f32 0.0, %v381
        %v383 = vpop.f32.mrb[0].mxu0
        %384 = vmatprep.mubr.f32.mxu0 0.0
        %385 = vmatmul.mubr.f32.gmra.mrb[0].mxu0 %v252
        %v386 = vpop.f32.mrb[0].mxu0
        %v387 = vadd.f32 0.0, %v386
        %v388 = vpop.f32.mrb[0].mxu0
        %389 = vmatprep.mubr.f32.mxu0 0.0
        %390 = vmatmul.mubr.f32.gmra.mrb[0].mxu0 %v253
        %v391 = vpop.f32.mrb[0].mxu0
        %v392 = vadd.f32 0.0, %v391
        %v393 = vpop.f32.mrb[0].mxu0
        %394 = vmatprep.mubr.f32.mxu0 0.0
        %395 = vmatmul.mubr.f32.gmra.mrb[0].mxu0 %v254
        %v396 = vpop.f32.mrb[0].mxu0
        %v397 = vadd.f32 0.0, %v396
        %v398 = vpop.f32.mrb[0].mxu0
        %399 = vmatprep.mubr.f32.mxu0 0.0
        %400 = vmatmul.mubr.f32.gmra.mrb[0].mxu0 %v255
        %v401 = vpop.f32.mrb[0].mxu0
        %v402 = vadd.f32 0.0, %v401
        %v403 = vpop.f32.mrb[0].mxu0
        %404 = vmatprep.mubr.f32.mxu0 0.0
        %405 = vmatmul.mubr.f32.gmra.mrb[0].mxu0 %v256
        %v406 = vpop.f32.mrb[0].mxu0
        %v407 = vadd.f32 0.0, %v406
        %v408 = vpop.f32.mrb[0].mxu0
        %409 = vmatprep.mubr.f32.mxu0 0.0
        %410 = vmatmul.mubr.f32.gmra.mrb[0].mxu0 %v257
        %v411 = vpop.f32.mrb[0].mxu0
        %v412 = vadd.f32 0.0, %v411
        %v413 = vpop.f32.mrb[0].mxu0
        %414 = vmatprep.mubr.f32.mxu0 0.0
        %415 = vmatmul.mubr.f32.gmra.mrb[0].mxu0 %v258
        %v416 = vpop.f32.mrb[0].mxu0
        %v417 = vadd.f32 0.0, %v416
        %v418 = vpop.f32.mrb[0].mxu0
        %419 = vdwg.mxu0
        %420 = vst [vmem:[%s137] sm:$0xff] %v342
        %421 = vst [vmem:[%s137 + $0x8] sm:$0xff] %v347
        %422 = vst [vmem:[%s137 + $0x10] sm:$0xff] %v352
        %423 = vst [vmem:[%s137 + $0x18] sm:$0xff] %v357
        %424 = vst [vmem:[%s137 + $0x20] sm:$0xff] %v362
        %425 = vst [vmem:[%s137 + $0x28] sm:$0xff] %v367
        %426 = vst [vmem:[%s137 + $0x30] sm:$0xff] %v372
        %427 = vst [vmem:[%s137 + $0x38] sm:$0xff] %v377
        %428 = vst [vmem:[%s137 + $0x40] sm:$0xff] %v382
        %429 = vst [vmem:[%s137 + $0x48] sm:$0xff] %v387
        %430 = vst [vmem:[%s137 + $0x50] sm:$0xff] %v392
        %431 = vst [vmem:[%s137 + $0x58] sm:$0xff] %v397
        %432 = vst [vmem:[%s137 + $0x60] sm:$0xff] %v402
        %433 = vst [vmem:[%s137 + $0x68] sm:$0xff] %v407
        %434 = vst [vmem:[%s137 + $0x70] sm:$0xff] %v412
        %435 = vst [vmem:[%s137 + $0x78] sm:$0xff] %v417
        %s436 = sand.u32 %s71, 1
        %s437 = scalar_lea.sflag [#allocation3], %s436
        %s438 = sand.u32 %s71, 1
        %s439 = smul.addr %s438, 128
        %s440 = scalar_lea.vmem [#allocation2], %s439
        // Predicated region
        $region29: #{tpu_custom_call.1} parent=27 // pred_check
          %p441 = pneg %p81
        $region30: #{tpu_custom_call.1} parent=27 // pred_check_branch
          %443 = sbr.rel (%p441) target = $region32
        $region31: #{tpu_custom_call.1} parent=27 // pred_region
          %s444 = smul.u32 16, %s16
          %s446 = ssub.s32 2048, 2048
          %447 = vsyncadd %s437, %s446
          %s448 = smul.addr %s444, 128
          %s449 = scalar_lea.hbm %s2, %s448
          %s450 = sshll.u32 %s440, 4
          %s451 = int_to_ptr.vmem [resolvable:$true] %s450
          %456 = dma.vmem_to_hbm [thread:$0]  %s451, 2048, %s449, %s437, 128, 128, 8
        $region32: #{tpu_custom_call.1} parent=27 // pred_fallthru
          _
      $region28: #{tpu_custom_call.1} parent=5 // pred_fallthru
        _
      %p457 = scmp.le.s32.totalorder 2, %s11
      // Predicated region
      $region33: #{tpu_custom_call.1} parent=5 // pred_check
        %p458 = pneg %p457
      $region34: #{tpu_custom_call.1} parent=5 // pred_check_branch
        %460 = sbr.rel (%p458) target = $region36
      $region35: #{tpu_custom_call.1} parent=5 // pred_region
        %s461 = ssub.s32 %s11, 2
        // Predicated region
        $region37: #{tpu_custom_call.1} parent=35 // pred_check
          %p462 = pneg %p87
        $region38: #{tpu_custom_call.1} parent=35 // pred_check_branch
          %464 = sbr.rel (%p462) target = $region40
        $region39: #{tpu_custom_call.1} parent=35 // pred_region
          %s465 = sand.u32 %s72, 1
          %s466 = scalar_lea.sflag [#allocation3], %s465
          %s467 = sand.u32 %s72, 1
          %s468 = smul.addr %s467, 128
          %s469 = scalar_lea.vmem [#allocation2], %s468
          %470 = dma.done %s466, 2048
        $region40: #{tpu_custom_call.1} parent=35 // pred_fallthru
          _
      $region36: #{tpu_custom_call.1} parent=5 // pred_fallthru
        _
    $region6: #{tpu_custom_call.1} parent=1 // loop_footer
      %s15 = sadd.s32 1, %s11
    $region7: #{tpu_custom_call.1} parent=1 // loop_footer_branch
      %10 = sbr.rel target = $region3
    $region8: #{tpu_custom_call.1} parent=1 // loop_exit
      _
    %471 = vsyncpa [#allocation3], 1
    %s472 = scalar_lea.sflag [#allocation3], 1
    %473 = vsyncpa %s472, 1

</llo_original>
